<compile_context>
chip_gen: v5e
topology: v5e:2x2
jax: 0.10.0
libtpu: 0.0.40
codegen_flags: <defaults>
</compile_context>

<pallas_src>
import functools

import jax
import jax.numpy as jnp
from jax.experimental import pallas as pl
from jax.experimental.pallas import tpu as pltpu


def _round_up(v, m):
    return (v + m - 1) // m * m


def _cdiv(a, b):
    return (a + b - 1) // b


# ---------------------------------------------------------------------------
# Kernels
# ---------------------------------------------------------------------------

def _cg_kernel_resident(x_ref, wt_ref, b_ref, o_ref):
    """1-D grid over batch; full (D, D) bf16 weight resident in VMEM."""
    x = x_ref[...]                                  # (tb, D) f32, single stream
    z = jnp.dot(x.astype(jnp.bfloat16), wt_ref[...],
                preferred_element_type=jnp.float32) + b_ref[...]
    o_ref[...] = (x.astype(jnp.float32) * jax.nn.sigmoid(z)).astype(o_ref.dtype)


def _cg_kernel_ntiled(x_ref, wt_ref, b_ref, o_ref, *, tn):
    """Grid = (j: out-feature tile [outer], i: batch tile [inner]).

    The (D, tn) weight stripe has a constant block index across the inner batch
    sweep -> fetched once per j; only x re-streams. Gate uses the matching
    columns of the same f32 x block (no second x stream)."""
    j = pl.program_id(0)
    off = pl.multiple_of(j * tn, 128)
    z = jnp.dot(x_ref[...].astype(jnp.bfloat16), wt_ref[...],
                preferred_element_type=jnp.float32) + b_ref[...]
    xg = x_ref[:, pl.ds(off, tn)]                   # gate slice from the same block
    o_ref[...] = (xg.astype(jnp.float32) * jax.nn.sigmoid(z)).astype(o_ref.dtype)


# ---------------------------------------------------------------------------
# Wrapper
# ---------------------------------------------------------------------------

_WEIGHT_RESIDENT_BYTES = 6 << 20   # keep full bf16 weight resident below this
_WEIGHT_TILE_BYTES = 4 << 20       # per-buffer weight-stripe cap when N-tiling
_VMEM_BUDGET = 40 << 20            # tile-selection budget (fits v7x 64 MiB VMEM)
_VMEM_LIMIT_BYTES = 48 << 20       # explicit scoped-VMEM limit (safe on v5e/v6e/v7x)


def prepare_params(w, b):
    """One-time weight prep: pad to lane-dense D, transpose to (in, out), bf16.

    Call once per weight (e.g. at module init), NOT per forward pass — this is
    a full D^2 HBM read+write that would otherwise double the dominant stream
    in the weight-bandwidth-bound regime."""
    D = w.shape[0]
    assert w.shape == (D, D) and b.shape == (D,)
    D_pad = _round_up(D, 128)
    wt = jnp.pad(w.T, ((0, D_pad - D), (0, D_pad - D))).astype(jnp.bfloat16)
    b2 = jnp.pad(b, (0, D_pad - D)).astype(jnp.float32).reshape(1, D_pad)
    return wt, b2


def context_gating_prepped(x, wt, b2, *, tb=None, tn=None):
    """Context gating with pre-packed params: x * sigmoid(x @ W^T + b)."""
    B, D = x.shape
    D_pad = wt.shape[0]
    assert wt.shape == (D_pad, D_pad) and b2.shape == (1, D_pad) and D_pad >= D

    itemsize = jnp.dtype(x.dtype).itemsize

    # ---- output-feature tile -------------------------------------------------
    if tn is None:
        if D_pad * D_pad * 2 <= _WEIGHT_RESIDENT_BYTES:
            tn = D_pad                               # full weight stays resident
        else:
            tn = None
            for t in (512, 256, 128):                # prefer >=256: v6e/v7x MXU width
                if D_pad % t == 0 and D_pad * t * 2 <= _WEIGHT_TILE_BYTES:
                    tn = t
                    break
            if tn is None:                           # huge D: keep MXU-friendly width
                tn = 256 if D_pad % 256 == 0 else 128
    assert D_pad % tn == 0 and tn % 128 == 0

    # ---- batch tile ------------------------------------------------------------
    if tb is None:
        n_bt = max(1, _cdiv(B, 512))                 # tiles of <=~512 rows, min pad waste
        tb = _round_up(_cdiv(B, n_bt), 8)
        if B >= 64 and _cdiv(B, tb) < 2:             # >=2 tiles: megacore / v7x dual-TC
            tb = _round_up(_cdiv(B, 2), 8)

        def _vmem(tb_):                              # double-buffered working set
            return 2 * (tb_ * D_pad * itemsize       # x (single f32 stream, full row)
                        + D_pad * tn * 2             # bf16 weight tile
                        + tn * 4                     # bias
                        + tb_ * tn * itemsize)       # output tile

        while tb > 8 and _vmem(tb) > _VMEM_BUDGET:
            tb = _round_up(tb // 2, 8)
    assert tb % 8 == 0
    B_pad = _round_up(B, tb)

    # Zero padding keeps the tail exact: padded weight cols + zero bias ->
    # sigmoid(0)=0.5 multiplied by zero-padded x, then sliced off.
    x_pad = jnp.pad(x, ((0, B_pad - B), (0, D_pad - D)))

    # ---- cost estimate: real (amplified) HBM traffic under the chosen grid ----
    n_j = D_pad // tn
    cost = pl.CostEstimate(
        flops=2 * B_pad * D_pad * D_pad,
        transcendentals=B_pad * D_pad,
        bytes_accessed=(n_j * B_pad * D_pad * itemsize   # x re-read per N stripe
                        + D_pad * D_pad * 2              # weight read once
                        + D_pad * 4                      # bias
                        + B_pad * D_pad * itemsize),     # output write
    )

    if tn == D_pad:
        # Weight-resident path: 1-D grid over batch, weight DMA'd exactly once.
        grid_spec = pltpu.PrefetchScalarGridSpec(
            num_scalar_prefetch=0,
            grid=(B_pad // tb,),
            in_specs=[
                pl.BlockSpec((tb, D_pad), lambda i: (i, 0)),     # x, single f32 stream
                pl.BlockSpec((D_pad, D_pad), lambda i: (0, 0)),  # weight, resident
                pl.BlockSpec((1, D_pad), lambda i: (0, 0)),      # bias, resident
            ],
            out_specs=pl.BlockSpec((tb, D_pad), lambda i: (i, 0)),
        )
        kernel = _cg_kernel_resident
        dims = ("parallel",)
    else:
        # N-tiled path: j (out-feature) outer, i (batch) inner -> weight stripe
        # resident across the batch sweep; only x re-streams.
        grid_spec = pltpu.PrefetchScalarGridSpec(
            num_scalar_prefetch=0,
            grid=(D_pad // tn, B_pad // tb),                     # (j outer, i inner)
            in_specs=[
                pl.BlockSpec((tb, D_pad), lambda j, i: (i, 0)),  # x, full row
                pl.BlockSpec((D_pad, tn), lambda j, i: (0, j)),  # weight stripe
                pl.BlockSpec((1, tn), lambda j, i: (0, j)),      # bias slice
            ],
            out_specs=pl.BlockSpec((tb, tn), lambda j, i: (i, j)),
        )
        kernel = functools.partial(_cg_kernel_ntiled, tn=tn)
        dims = ("parallel", "parallel")

    out = pl.pallas_call(
        kernel,
        out_shape=jax.ShapeDtypeStruct((B_pad, D_pad), x.dtype),
        grid_spec=grid_spec,
        compiler_params=pltpu.CompilerParams(
            dimension_semantics=dims,
            vmem_limit_bytes=_VMEM_LIMIT_BYTES,
        ),
        cost_estimate=cost,
    )(x_pad, wt, b2)
    return out[:B, :D]


def context_gating(x, w, b, *, tb=None, tn=None):
    """Convenience wrapper: w in PyTorch Linear layout (out, in).

    Prefer prepare_params() + context_gating_prepped() so the weight
    transpose/pad/bf16 pass happens once, not per call."""
    wt, b2 = prepare_params(w, b)
    return context_gating_prepped(x, wt, b2, tb=tb, tn=tn)


# ---------------------------------------------------------------------------
# Demo / correctness check
# ---------------------------------------------------------------------------

if __name__ == "__main__":
    key = jax.random.PRNGKey(0)
    B, D = 8, 256  # small demo shape; feature axis lane-aligned

    kx, kw, kb = jax.random.split(key, 3)
    x = jax.random.normal(kx, (B, D), dtype=jnp.float32)

    # Deterministic PyTorch-style Linear init (uniform bound 1/sqrt(D))
    bound = 1.0 / (D ** 0.5)
    w = jax.random.uniform(kw, (D, D), dtype=jnp.float32, minval=-bound, maxval=bound)
    b = jax.random.uniform(kb, (D,), dtype=jnp.float32, minval=-bound, maxval=bound)

    # One-time weight prep, hoisted out of the forward path.
    wt, b2 = prepare_params(w, b)

    # Default (weight-resident) path.
    out = jax.block_until_ready(context_gating_prepped(x, wt, b2))
    assert out.shape == (B, D)

    # Semantics check vs the exact f32 PyTorch formula (loose tol: bf16 MXU operands).
    ref32 = x * jax.nn.sigmoid(x @ w.T + b)
    assert jnp.allclose(out, ref32, atol=5e-2, rtol=5e-2)

    # Tight check vs a bf16-operand / f32-accumulate reference (same math as kernel).
    ref16 = (x * jax.nn.sigmoid(
        jnp.dot(x.astype(jnp.bfloat16), w.T.astype(jnp.bfloat16),
                preferred_element_type=jnp.float32) + b)).astype(x.dtype)
    assert jnp.allclose(out, ref16, atol=2e-3, rtol=2e-3)

    # Also exercise the N-tiled (weight-stripe, j-outer) path with forced tiles.
    out_tiled = jax.block_until_ready(context_gating_prepped(x, wt, b2, tb=8, tn=128))
    assert jnp.allclose(out_tiled, ref16, atol=2e-3, rtol=2e-3)

    print("KERNEL_OK")
</pallas_src>

<mosaic_0001>
module attributes {stable_mosaic.version = 11 : i64} {
  func.func @_cg_kernel_resident(%arg0: i32, %arg1: memref<8x256xf32, #tpu.memory_space<vmem>>, %arg2: memref<256x256xbf16, #tpu.memory_space<vmem>>, %arg3: memref<1x256xf32, #tpu.memory_space<vmem>>, %arg4: memref<8x256xf32, #tpu.memory_space<vmem>>) attributes {dimension_semantics = [#tpu.dimension_semantics<parallel>], iteration_bounds = array<i64: 1>, scalar_prefetch = 0 : i64, scratch_operands = 0 : i64, tpu.core_type = #tpu.core_type<tc>, window_params = [{transform_indices = @transform_0, window_bounds = array<i64: 8, 256>}, {pipeline_mode = #tpu.pipeline_mode<synchronous>, transform_indices = @transform_1, window_bounds = array<i64: 256, 256>}, {pipeline_mode = #tpu.pipeline_mode<synchronous>, transform_indices = @transform_2, window_bounds = array<i64: 1, 256>}, {transform_indices = @transform_3, window_bounds = array<i64: 8, 256>}]} {
    %c0 = arith.constant 0 : index
    %c0_0 = arith.constant 0 : index
    %0 = vector.load %arg1[%c0, %c0_0] : memref<8x256xf32, #tpu.memory_space<vmem>>, vector<8x256xf32>
    %1 = arith.truncf %0 : vector<8x256xf32> to vector<8x256xbf16>
    %c0_1 = arith.constant 0 : index
    %c0_2 = arith.constant 0 : index
    %2 = vector.load %arg2[%c0_1, %c0_2] : memref<256x256xbf16, #tpu.memory_space<vmem>>, vector<256x256xbf16>
    %cst = arith.constant dense<0.000000e+00> : vector<8x256xf32>
    %3 = tpu.matmul %1, %2, %cst {dimension_numbers = #tpu.dot_dimension_numbers<[1], [0], [0], [1], [0, 0, 1, 1], [], []>} : vector<8x256xbf16>, vector<256x256xbf16>, vector<8x256xf32> -> vector<8x256xf32>
    %c0_3 = arith.constant 0 : index
    %c0_4 = arith.constant 0 : index
    %4 = vector.load %arg3[%c0_3, %c0_4] : memref<1x256xf32, #tpu.memory_space<vmem>>, vector<1x256xf32>
    %5 = vector.broadcast %4 : vector<1x256xf32> to vector<8x256xf32>
    %6 = arith.addf %3, %5 : vector<8x256xf32>
    %7 = arith.negf %6 : vector<8x256xf32>
    %8 = math.exp %7 : vector<8x256xf32>
    %cst_5 = arith.constant 1.000000e+00 : f32
    %9 = vector.broadcast %cst_5 : f32 to vector<8x256xf32>
    %10 = arith.addf %9, %8 : vector<8x256xf32>
    %11 = arith.divf %9, %10 : vector<8x256xf32>
    %12 = arith.mulf %0, %11 : vector<8x256xf32>
    %c0_6 = arith.constant 0 : index
    %c0_7 = arith.constant 0 : index
    %13 = vector.load %arg4[%c0_6, %c0_7] : memref<8x256xf32, #tpu.memory_space<vmem>>, vector<8x256xf32>
    tpu.vector_store %arg4[%c0_6, %c0_7], %12 {strides = array<i32>} : memref<8x256xf32, #tpu.memory_space<vmem>>, vector<8x256xf32>,
    return
  }
  func.func @transform_0(%arg0: i32) -> (i32, i32) {
    %c0_i32 = arith.constant 0 : i32
    %c0_i32_0 = arith.constant 0 : i32
    return %arg0, %c0_i32 : i32, i32
  }
  func.func @transform_1(%arg0: i32) -> (i32, i32) {
    %c0_i32 = arith.constant 0 : i32
    %c0_i32_0 = arith.constant 0 : i32
    %c0_i32_1 = arith.constant 0 : i32
    return %c0_i32, %c0_i32_0 : i32, i32
  }
  func.func @transform_2(%arg0: i32) -> (i32, i32) {
    %c0_i32 = arith.constant 0 : i32
    %c0_i32_0 = arith.constant 0 : i32
    %c0_i32_1 = arith.constant 0 : i32
    return %c0_i32, %c0_i32_0 : i32, i32
  }
  func.func @transform_3(%arg0: i32) -> (i32, i32) {
    %c0_i32 = arith.constant 0 : i32
    %c0_i32_0 = arith.constant 0 : i32
    return %arg0, %c0_i32 : i32, i32
  }
}

</mosaic_0001>

<llo_original>
// kernel: tpu_custom_call.1
$region0: #{tpu_custom_call.1}
  #allocation0 [shape = 'u32[]', space=smem, size = 0x4, offset = 0x4, fixed_abs, tag = 'smem constant byte address 0x4 - core index']
  #allocation1 [shape = 'u32[72,128]{1,0:T(1,128)}', space=vmem, size = 0x9000, scoped, tag = 'internal scratch']
  %s0 = inlined_call_operand.hbm [shape: f32[8,256], index: 0, kind: input, shape index: {}]
  %s1 = inlined_call_operand.hbm [shape: bf16[256,256], index: 1, kind: input, shape index: {}]
  %s2 = inlined_call_operand.hbm [shape: f32[1,256], index: 2, kind: input, shape index: {}]
  %s3 = inlined_call_operand.hbm [shape: f32[8,256], index: 3, kind: output, shape index: {}]
  %s4 = sld [smem:[#allocation0]]
  $region34: #{tpu_custom_call.1} parent=0
    _
  %s6 = ssub.s32 1, %s4
  %s7 = scalar_select 0, %s6, %s4
  $region1: #{tpu_custom_call.1} parent=0
    #allocation2 [shape = 'u8[8192]{0}', space=vmem, size = 0x2000, scoped, tag = 'input window, operand 0, single buffered']
    #allocation3 [shape = 's32[1]{0}', space=sflag, size = 0x4, scoped, tag = 'scoped memory for tpu_custom_call.1']
    #allocation4 [shape = 's32[1]{0}', space=sflag, size = 0x4, scoped, tag = 'scoped memory for tpu_custom_call.1']
    #allocation5 [shape = 'u8[131072]{0}', space=vmem, size = 0x20000, scoped, tag = 'input window, operand 1, single buffered']
    #allocation6 [shape = 's32[1]{0}', space=sflag, size = 0x4, scoped, tag = 'scoped memory for tpu_custom_call.1']
    #allocation7 [shape = 'u8[1024]{0}', space=vmem, size = 0x400, scoped, tag = 'input window, operand 2, single buffered']
    #allocation8 [shape = 'u8[8192]{0}', space=vmem, size = 0x2000, scoped, tag = 'output window, operand 0, single buffered']
    %8 = vsyncpa [#allocation3], 0
    %9 = vsyncpa [#allocation6], 0
    %10 = vsyncpa [#allocation4], 0
    // Predicated region
    $region2: #{tpu_custom_call.1} parent=1 // pred_check
      _
    $region3: #{tpu_custom_call.1} parent=1 // pred_check_branch
      %12 = sbr.rel (0) target = $region5
    $region4: #{tpu_custom_call.1} parent=1 // pred_region
      %14 = vsyncadd [#allocation3], 0
      %s16 = sshll.u32 %s0, 4
      %s17 = int_to_ptr.hbm [resolvable:$true] %s16
      %s18 = sshll.u32 [#allocation2], 4
      %s19 = int_to_ptr.vmem [resolvable:$true] %s18
      %21 = dma.hbm_to_vmem [thread:$0]  %s17, 256, %s19, [#allocation3]
    $region5: #{tpu_custom_call.1} parent=1 // pred_fallthru
      _
    // Predicated region
    $region6: #{tpu_custom_call.1} parent=1 // pred_check
      _
    $region7: #{tpu_custom_call.1} parent=1 // pred_check_branch
      %23 = sbr.rel (0) target = $region9
    $region8: #{tpu_custom_call.1} parent=1 // pred_region
      %25 = vsyncadd [#allocation6], 0
      %s26 = sshll.u32 %s1, 4
      %s27 = int_to_ptr.hbm [resolvable:$true] %s26
      %s28 = sshll.u32 [#allocation5], 4
      %s29 = int_to_ptr.vmem [resolvable:$true] %s28
      %34 = dma.hbm_to_vmem [thread:$0]  %s27, 4096, %s29, [#allocation6], 128, 128, 8
    $region9: #{tpu_custom_call.1} parent=1 // pred_fallthru
      _
    // Predicated region
    $region10: #{tpu_custom_call.1} parent=1 // pred_check
      _
    $region11: #{tpu_custom_call.1} parent=1 // pred_check_branch
      %36 = sbr.rel (0) target = $region13
    $region12: #{tpu_custom_call.1} parent=1 // pred_region
      %38 = vsyncadd [#allocation6], 0
      %s40 = sshll.u32 %s2, 4
      %s41 = int_to_ptr.hbm [resolvable:$true] %s40
      %s42 = sshll.u32 [#allocation7], 4
      %s43 = int_to_ptr.vmem [resolvable:$true] %s42
      %45 = dma.hbm_to_vmem [thread:$0]  %s41, 32, %s43, [#allocation6]
    $region13: #{tpu_custom_call.1} parent=1 // pred_fallthru
      _
    // Predicated region
    $region14: #{tpu_custom_call.1} parent=1 // pred_check
      _
    $region15: #{tpu_custom_call.1} parent=1 // pred_check_branch
      %47 = sbr.rel (0) target = $region17
    $region16: #{tpu_custom_call.1} parent=1 // pred_region
      %49 = dma.done [#allocation3], 256
    $region17: #{tpu_custom_call.1} parent=1 // pred_fallthru
      _
    // Predicated region
    $region18: #{tpu_custom_call.1} parent=1 // pred_check
      _
    $region19: #{tpu_custom_call.1} parent=1 // pred_check_branch
      %51 = sbr.rel (0) target = $region21
    $region20: #{tpu_custom_call.1} parent=1 // pred_region
      %53 = dma.done [#allocation6], 4096
    $region21: #{tpu_custom_call.1} parent=1 // pred_fallthru
      _
    // Predicated region
    $region22: #{tpu_custom_call.1} parent=1 // pred_check
      _
    $region23: #{tpu_custom_call.1} parent=1 // pred_check_branch
      %55 = sbr.rel (0) target = $region25
    $region24: #{tpu_custom_call.1} parent=1 // pred_region
      %57 = dma.done [#allocation6], 32
    $region25: #{tpu_custom_call.1} parent=1 // pred_fallthru
      _
    %v58 = vld [vmem:[#allocation2] sm:$0xff]
    %v59 = vld [vmem:[#allocation2 + $0x8] sm:$0xff]
    %v60 = vpack.c.bf16 %v58, %v58
    %v61 = vpack.c.bf16 %v59, %v59
    %v62 = vld [vmem:[#allocation5] sm:$0xff]
    %v63 = vld [vmem:[#allocation5 + $0x8] sm:$0xff]
    %v64 = vld [vmem:[#allocation5 + $0x10] sm:$0xff]
    %v65 = vld [vmem:[#allocation5 + $0x18] sm:$0xff]
    %v66 = vld [vmem:[#allocation5 + $0x20] sm:$0xff]
    %v67 = vld [vmem:[#allocation5 + $0x28] sm:$0xff]
    %v68 = vld [vmem:[#allocation5 + $0x30] sm:$0xff]
    %v69 = vld [vmem:[#allocation5 + $0x38] sm:$0xff]
    %v70 = vld [vmem:[#allocation5 + $0x40] sm:$0xff]
    %v71 = vld [vmem:[#allocation5 + $0x48] sm:$0xff]
    %v72 = vld [vmem:[#allocation5 + $0x50] sm:$0xff]
    %v73 = vld [vmem:[#allocation5 + $0x58] sm:$0xff]
    %v74 = vld [vmem:[#allocation5 + $0x60] sm:$0xff]
    %v75 = vld [vmem:[#allocation5 + $0x68] sm:$0xff]
    %v76 = vld [vmem:[#allocation5 + $0x70] sm:$0xff]
    %v77 = vld [vmem:[#allocation5 + $0x78] sm:$0xff]
    %v78 = vld [vmem:[#allocation5 + $0x80] sm:$0xff]
    %v79 = vld [vmem:[#allocation5 + $0x88] sm:$0xff]
    %v80 = vld [vmem:[#allocation5 + $0x90] sm:$0xff]
    %v81 = vld [vmem:[#allocation5 + $0x98] sm:$0xff]
    %v82 = vld [vmem:[#allocation5 + $0xa0] sm:$0xff]
    %v83 = vld [vmem:[#allocation5 + $0xa8] sm:$0xff]
    %v84 = vld [vmem:[#allocation5 + $0xb0] sm:$0xff]
    %v85 = vld [vmem:[#allocation5 + $0xb8] sm:$0xff]
    %v86 = vld [vmem:[#allocation5 + $0xc0] sm:$0xff]
    %v87 = vld [vmem:[#allocation5 + $0xc8] sm:$0xff]
    %v88 = vld [vmem:[#allocation5 + $0xd0] sm:$0xff]
    %v89 = vld [vmem:[#allocation5 + $0xd8] sm:$0xff]
    %v90 = vld [vmem:[#allocation5 + $0xe0] sm:$0xff]
    %v91 = vld [vmem:[#allocation5 + $0xe8] sm:$0xff]
    %v92 = vld [vmem:[#allocation5 + $0xf0] sm:$0xff]
    %v93 = vld [vmem:[#allocation5 + $0xf8] sm:$0xff]
    %v94 = vld [vmem:[#allocation7] sm:$0x3]
    %v96 = vperm.slane %v94, 0
    %v97 = vperm.slane %v94, 1
    %v132 = vunpack.c.l.b16 %v62
    %v133 = vunpack.c.h.b16 %v62
    %v134 = vunpack.c.l.b16 %v63
    %v135 = vunpack.c.h.b16 %v63
    %v136 = vunpack.c.l.b16 %v64
    %v137 = vunpack.c.h.b16 %v64
    %v138 = vunpack.c.l.b16 %v65
    %v139 = vunpack.c.h.b16 %v65
    %v140 = vunpack.c.l.b16 %v66
    %v141 = vunpack.c.h.b16 %v66
    %v142 = vunpack.c.l.b16 %v67
    %v143 = vunpack.c.h.b16 %v67
    %v144 = vunpack.c.l.b16 %v68
    %v145 = vunpack.c.h.b16 %v68
    %v146 = vunpack.c.l.b16 %v69
    %v147 = vunpack.c.h.b16 %v69
    %v148 = vunpack.c.l.b16 %v70
    %v149 = vunpack.c.h.b16 %v70
    %v150 = vunpack.c.l.b16 %v71
    %v151 = vunpack.c.h.b16 %v71
    %v152 = vunpack.c.l.b16 %v72
    %v153 = vunpack.c.h.b16 %v72
    %v154 = vunpack.c.l.b16 %v73
    %v155 = vunpack.c.h.b16 %v73
    %v156 = vunpack.c.l.b16 %v74
    %v157 = vunpack.c.h.b16 %v74
    %v158 = vunpack.c.l.b16 %v75
    %v159 = vunpack.c.h.b16 %v75
    %v160 = vunpack.c.l.b16 %v76
    %v161 = vunpack.c.h.b16 %v76
    %v162 = vunpack.c.l.b16 %v77
    %v163 = vunpack.c.h.b16 %v77
    %v164 = vunpack.c.l.b16 %v78
    %v165 = vunpack.c.h.b16 %v78
    %v166 = vunpack.c.l.b16 %v79
    %v167 = vunpack.c.h.b16 %v79
    %v168 = vunpack.c.l.b16 %v80
    %v169 = vunpack.c.h.b16 %v80
    %v170 = vunpack.c.l.b16 %v81
    %v171 = vunpack.c.h.b16 %v81
    %v172 = vunpack.c.l.b16 %v82
    %v173 = vunpack.c.h.b16 %v82
    %v174 = vunpack.c.l.b16 %v83
    %v175 = vunpack.c.h.b16 %v83
    %v176 = vunpack.c.l.b16 %v84
    %v177 = vunpack.c.h.b16 %v84
    %v178 = vunpack.c.l.b16 %v85
    %v179 = vunpack.c.h.b16 %v85
    %v180 = vunpack.c.l.b16 %v86
    %v181 = vunpack.c.h.b16 %v86
    %v182 = vunpack.c.l.b16 %v87
    %v183 = vunpack.c.h.b16 %v87
    %v184 = vunpack.c.l.b16 %v88
    %v185 = vunpack.c.h.b16 %v88
    %v186 = vunpack.c.l.b16 %v89
    %v187 = vunpack.c.h.b16 %v89
    %v188 = vunpack.c.l.b16 %v90
    %v189 = vunpack.c.h.b16 %v90
    %v190 = vunpack.c.l.b16 %v91
    %v191 = vunpack.c.h.b16 %v91
    %v192 = vunpack.c.l.b16 %v92
    %v193 = vunpack.c.h.b16 %v92
    %v194 = vunpack.c.l.b16 %v93
    %v195 = vunpack.c.h.b16 %v93
    %v196 = vpack.c.b16 %v134, %v132
    %v197 = vpack.c.b16 %v135, %v133
    %v198 = vpack.c.b16 %v138, %v136
    %v199 = vpack.c.b16 %v139, %v137
    %v200 = vpack.c.b16 %v142, %v140
    %v201 = vpack.c.b16 %v143, %v141
    %v202 = vpack.c.b16 %v146, %v144
    %v203 = vpack.c.b16 %v147, %v145
    %v204 = vpack.c.b16 %v150, %v148
    %v205 = vpack.c.b16 %v151, %v149
    %v206 = vpack.c.b16 %v154, %v152
    %v207 = vpack.c.b16 %v155, %v153
    %v208 = vpack.c.b16 %v158, %v156
    %v209 = vpack.c.b16 %v159, %v157
    %v210 = vpack.c.b16 %v162, %v160
    %v211 = vpack.c.b16 %v163, %v161
    %v212 = vpack.c.b16 %v166, %v164
    %v213 = vpack.c.b16 %v167, %v165
    %v214 = vpack.c.b16 %v170, %v168
    %v215 = vpack.c.b16 %v171, %v169
    %v216 = vpack.c.b16 %v174, %v172
    %v217 = vpack.c.b16 %v175, %v173
    %v218 = vpack.c.b16 %v178, %v176
    %v219 = vpack.c.b16 %v179, %v177
    %v220 = vpack.c.b16 %v182, %v180
    %v221 = vpack.c.b16 %v183, %v181
    %v222 = vpack.c.b16 %v186, %v184
    %v223 = vpack.c.b16 %v187, %v185
    %v224 = vpack.c.b16 %v190, %v188
    %v225 = vpack.c.b16 %v191, %v189
    %v226 = vpack.c.b16 %v194, %v192
    %v227 = vpack.c.b16 %v195, %v193
    %260 = vmatpush.bf16.msra.mxu0 %v210
    %261 = vmatpush.bf16.msra.mxu0 %v208
    %262 = vmatpush.bf16.msra.mxu0 %v206
    %263 = vmatpush.bf16.msra.mxu0 %v204
    %264 = vmatpush.bf16.msra.mxu0 %v202
    %265 = vmatpush.bf16.msra.mxu0 %v200
    %266 = vmatpush.bf16.msra.mxu0 %v198
    %267 = vmatpush.bf16.msra.mxu0 %v196
    %268 = vmatmul.bf16.gmra.mxu0 %v60
    %v269 = vpop.f32.mrf.mxu0
    %v270 = vadd.f32 %v96, %v269
    %v271 = vpop.f32.mrf.mxu0
    %272 = vdwg.mxu0
    %273 = vmatpush.bf16.msra.mxu0 %v226
    %274 = vmatpush.bf16.msra.mxu0 %v224
    %275 = vmatpush.bf16.msra.mxu0 %v222
    %276 = vmatpush.bf16.msra.mxu0 %v220
    %277 = vmatpush.bf16.msra.mxu0 %v218
    %278 = vmatpush.bf16.msra.mxu0 %v216
    %279 = vmatpush.bf16.msra.mxu0 %v214
    %280 = vmatpush.bf16.msra.mxu0 %v212
    %281 = vmatmul.bf16.gmra.mxu0 %v61
    %v282 = vpop.f32.mrf.mxu0
    %v283 = vadd.f32 %v270, %v282
    %v284 = vpop.f32.mrf.mxu0
    %285 = vdwg.mxu0
    %286 = vmatpush.bf16.msra.mxu0 %v211
    %287 = vmatpush.bf16.msra.mxu0 %v209
    %288 = vmatpush.bf16.msra.mxu0 %v207
    %289 = vmatpush.bf16.msra.mxu0 %v205
    %290 = vmatpush.bf16.msra.mxu0 %v203
    %291 = vmatpush.bf16.msra.mxu0 %v201
    %292 = vmatpush.bf16.msra.mxu0 %v199
    %293 = vmatpush.bf16.msra.mxu0 %v197
    %294 = vmatmul.bf16.gmra.mxu0 %v60
    %v295 = vpop.f32.mrf.mxu0
    %v296 = vadd.f32 %v97, %v295
    %v297 = vpop.f32.mrf.mxu0
    %298 = vdwg.mxu0
    %299 = vmatpush.bf16.msra.mxu0 %v227
    %300 = vmatpush.bf16.msra.mxu0 %v225
    %301 = vmatpush.bf16.msra.mxu0 %v223
    %302 = vmatpush.bf16.msra.mxu0 %v221
    %303 = vmatpush.bf16.msra.mxu0 %v219
    %304 = vmatpush.bf16.msra.mxu0 %v217
    %305 = vmatpush.bf16.msra.mxu0 %v215
    %306 = vmatpush.bf16.msra.mxu0 %v213
    %307 = vmatmul.bf16.gmra.mxu0 %v61
    %v308 = vpop.f32.mrf.mxu0
    %v309 = vadd.f32 %v296, %v308
    %v310 = vpop.f32.mrf.mxu0
    %311 = vdwg.mxu0
    %v312 = vxor.u32 %v283, 2147483648
    %v313 = vxor.u32 %v309, 2147483648
    %v314 = vmul.f32 %v312, 1.442695
    %v315 = vpow.pop %v314
    %v316 = vmul.f32 %v313, 1.442695
    %v317 = vpow.pop %v316
    %v318 = vadd.f32 %v315, 1.0
    %v319 = vadd.f32 %v317, 1.0
    %v320 = vrcp.pop %v318
    %v321 = vmul.f32 %v318, %v320
    %v322 = vsub.f32 1.0, %v321
    %v323 = vmul.f32 %v320, %v322
    %v324 = vadd.f32 %v320, %v323
    %vm325 = vweird.f32 %v318
    %vm326 = vweird.f32 %v320
    %vm327 = vmor %vm325, %vm326
    %v328 = vsel %vm327, %v320, %v324
    %v329 = vand.u32 2147483647, %v318
    %vm330 = vcmp.eq.f32.partialorder %v329, 8.507059e+37
    %v331 = vand.u32 %v318, 2147483648
    %v332 = vor.u32 1.1754944e-38, %v331
    %v333 = vsel %vm330, %v332, %v328
    %v334 = vmul.f32 1.0, %v333
    %v335 = vrcp.pop %v319
    %v336 = vmul.f32 %v319, %v335
    %v337 = vsub.f32 1.0, %v336
    %v338 = vmul.f32 %v335, %v337
    %v339 = vadd.f32 %v335, %v338
    %vm340 = vweird.f32 %v319
    %vm341 = vweird.f32 %v335
    %vm342 = vmor %vm340, %vm341
    %v343 = vsel %vm342, %v335, %v339
    %v344 = vand.u32 2147483647, %v319
    %vm345 = vcmp.eq.f32.partialorder %v344, 8.507059e+37
    %v346 = vand.u32 %v319, 2147483648
    %v347 = vor.u32 1.1754944e-38, %v346
    %v348 = vsel %vm345, %v347, %v343
    %v349 = vmul.f32 1.0, %v348
    %v350 = vmul.f32 %v58, %v334
    %v351 = vmul.f32 %v59, %v349
    %352 = vst [vmem:[#allocation8] sm:$0xff] %v350
    %353 = vst [vmem:[#allocation8 + $0x8] sm:$0xff] %v351
    // Predicated region
    $region26: #{tpu_custom_call.1} parent=1 // pred_check
      _
    $region27: #{tpu_custom_call.1} parent=1 // pred_check_branch
      %355 = sbr.rel (0) target = $region29
    $region28: #{tpu_custom_call.1} parent=1 // pred_region
      %357 = vsyncadd [#allocation4], 0
      %s359 = sshll.u32 [#allocation8], 4
      %s360 = int_to_ptr.vmem [resolvable:$true] %s359
      %s361 = sshll.u32 %s3, 4
      %s362 = int_to_ptr.hbm [resolvable:$true] %s361
      %364 = dma.vmem_to_hbm [thread:$0]  %s360, 256, %s362, [#allocation4]
    $region29: #{tpu_custom_call.1} parent=1 // pred_fallthru
      _
    // Predicated region
    $region30: #{tpu_custom_call.1} parent=1 // pred_check
      _
    $region31: #{tpu_custom_call.1} parent=1 // pred_check_branch
      %366 = sbr.rel (0) target = $region33
    $region32: #{tpu_custom_call.1} parent=1 // pred_region
      %368 = dma.done [#allocation4], 256
    $region33: #{tpu_custom_call.1} parent=1 // pred_fallthru
      _
    %369 = vsyncpa [#allocation3], 1
    %370 = vsyncpa [#allocation6], 1
    %371 = vsyncpa [#allocation4], 1

</llo_original>
